<compile_context>
chip_gen: v7x
topology: tpu7x:2x2x1
jax: 0.10.0
libtpu: 0.0.40
codegen_flags: <defaults>
</compile_context>

<pallas_src>
import math
import numpy as np

import jax
import jax.numpy as jnp
from jax.experimental import pallas as pl
from jax.experimental.pallas import tpu as pltpu


# ----------------------------------------------------------------------------
# Constant construction (numpy, compile-time)
# ----------------------------------------------------------------------------
def _gaussian_1d(kernel_size: int, sigma: float) -> np.ndarray:
    """Normalized 1-D Gaussian taps; outer(g, g) equals the module's 2-D kernel."""
    coords = np.arange(kernel_size, dtype=np.float64)
    mean = (kernel_size - 1) / 2.0
    g = (1.0 / (sigma * math.sqrt(2.0 * math.pi))) * np.exp(
        -(((coords - mean) / sigma) ** 2) / 2.0
    )
    return g / g.sum()


def _blur_matrix(length: int, w1d: np.ndarray, pad: int) -> np.ndarray:
    """(length x length) matrix = valid 1-D Gaussian conv composed with reflect pad."""
    K = w1d.shape[0]
    Lp = length + 2 * pad
    # Reflect-pad matrix P: (Lp x length), torch/jnp 'reflect' (edge not repeated).
    P = np.zeros((Lp, length), np.float64)
    for m in range(Lp):
        if m < pad:
            o = pad - m
        elif m < pad + length:
            o = m - pad
        else:
            o = 2 * length - 2 - (m - pad)
        P[m, o] = 1.0
    # Banded valid-conv matrix G: (length x Lp).
    G = np.zeros((length, Lp), np.float64)
    for i in range(length):
        G[i, i : i + K] = w1d
    return G @ P


def _round_up(v: int, m: int) -> int:
    return -(-v // m) * m


# ----------------------------------------------------------------------------
# Wrapper + Pallas kernel
# ----------------------------------------------------------------------------
def make_mse_blur_loss(channels=3, kernel_size=5, sigma=1.0, precision=None):
    """precision: MXU precision for the two matmuls.  None (DEFAULT, single
    bf16 MXU pass) keeps the kernel HBM-bound on every TPU generation; pass
    jax.lax.Precision.HIGHEST only if bit-tight accuracy is required."""
    pad = kernel_size // 2
    w1d = _gaussian_1d(kernel_size, float(sigma))

    def _kernel(x_ref, y_ref, awT_ref, mh_ref, out_ref):
        # x_ref, y_ref : (BP, H, W) unpadded planes (native dtype, upcast here).
        # awT_ref      : (W, W) = A_w^T
        # mh_ref       : (H, H) = A_h^T @ A_h
        # out_ref      : (1, 8, 128) lane-dense per-block partial sum.
        bp, h, w = x_ref.shape
        # In-kernel upcast: bf16 inputs stay bf16 in HBM (half the DMA bytes).
        d = x_ref[...].astype(jnp.float32) - y_ref[...].astype(jnp.float32)

        # W (row) pass as one 2-D MXU matmul: t_b = d_b @ A_w^T.
        # The flatten/unflatten is a free view when H % 8 == 0 (no (8,128) tile
        # crossing); typical image heights satisfy this.
        # TODO(synk): for H % 8 != 0 the reshape costs a relayout copy; fold an
        # 8-row zero pad into A_h at constant-build time instead.
        t = jnp.dot(
            d.reshape(bp * h, w),
            awT_ref[...],
            preferred_element_type=jnp.float32,
            precision=precision,
        ).reshape(bp, h, w)

        # Batched Gram over the lane (W) axis on the MXU: S_b = t_b @ t_b^T
        # (no in-kernel transpose needed).
        s = jnp.einsum(
            "bhw,bgw->bhg",
            t,
            t,
            preferred_element_type=jnp.float32,
            precision=precision,
        )  # (BP, H, H)

        # sum_b ||A_h @ t_b||_F^2 == <A_h^T A_h, sum_b S_b>
        partial = jnp.sum(mh_ref[...] * jnp.sum(s, axis=0))

        # Lane-dense store (unmasked vst); wrapper reads [:, 0, 0].
        out_ref[...] = jnp.broadcast_to(partial, out_ref.shape)

    def loss_fn(x, y):
        # x, y: (N, C, H, W) like the PyTorch module (NCHW).
        N, C, H, W = x.shape
        assert C == channels
        nc = N * C

        # Fold reflect pad + 1-D Gaussian into banded matrices (f64 build -> f32).
        a_h = _blur_matrix(H, w1d, pad)                        # (H, H)
        a_w = _blur_matrix(W, w1d, pad)                        # (W, W)
        awT = jnp.asarray(a_w.T, dtype=jnp.float32)
        mh = jnp.asarray(a_h.T @ a_h, dtype=jnp.float32)

        # Keep inputs in their native floating dtype (bf16 stays bf16 -> half
        # the HBM traffic); the kernel upcasts to f32 inside VMEM.
        in_dtype = jnp.promote_types(x.dtype, y.dtype)
        if not jnp.issubdtype(in_dtype, jnp.floating):
            in_dtype = jnp.float32
        xp = x.reshape(nc, H, W).astype(in_dtype)
        yp = y.reshape(nc, H, W).astype(in_dtype)
        itemsize = jnp.dtype(in_dtype).itemsize

        # ---- generation-aware VMEM budget -> planes per grid step (bp) ----
        try:
            info = pltpu.get_tpu_info()
            vmem_cap = int(getattr(info, "vmem_capacity_bytes", 0)) or (64 << 20)
        except Exception:       # no TPU info available -> v7x-safe fallback
            vmem_cap = 64 << 20
        vmem_limit = int(min((vmem_cap * 3) // 4, 96 << 20))   # 96 MiB on v5e/v6e, 48 MiB on v7x

        ph, pwl = _round_up(H, 8), _round_up(W, 128)           # (8,128) tile padding
        in_plane = ph * pwl * itemsize                         # one plane of one input
        f32_plane = ph * pwl * 4                               # d / t temporaries
        gram_plane = ph * _round_up(H, 128) * 4                # one (H,H) slice of S
        const_bytes = (_round_up(W, 8) * _round_up(W, 128)
                       + _round_up(H, 8) * _round_up(H, 128)) * 4   # awT + mh (single-buffered)
        per_plane = 4 * in_plane + 2 * f32_plane + gram_plane  # 2 inputs x 2 pipeline bufs + d,t + S
        budget = (vmem_limit * 4) // 5 - const_bytes - 2 * 8 * 128 * 4  # 20% headroom + out bufs
        bp_max = budget // per_plane

        if bp_max < 1:
            # A single plane (plus constants) does not fit the VMEM budget.
            # TODO(synk): spatially tile huge planes inside the kernel; fall
            # back to plain XLA so we never exceed the VMEM limit.
            d = (x.astype(jnp.float32) - y.astype(jnp.float32)).reshape(nc, H, W)
            t = jnp.einsum("bhw,wv->bhv", d, awT)
            u = jnp.einsum("hg,bgw->bhw", jnp.asarray(a_h, jnp.float32), t)
            return jnp.sum(u * u) / jnp.float32(nc * H * W)

        bp_max = int(min(bp_max, nc))
        if nc >= 2:
            # Keep >= 2 blocks so the "parallel" grid axis can actually split
            # across the two TensorCores of a v7x megacore.
            bp_max = max(1, min(bp_max, nc // 2))
        # Largest divisor of nc that fits -> exact tiling: no tail zero-pad /
        # concatenate (which would cost a full extra HBM pass on a mem-bound kernel).
        bp = 1
        for cand in range(bp_max, 0, -1):
            if nc % cand == 0:
                bp = cand
                break
        g = nc // bp

        partials = pl.pallas_call(
            _kernel,
            out_shape=jax.ShapeDtypeStruct((g, 8, 128), jnp.float32),
            grid_spec=pltpu.PrefetchScalarGridSpec(
                num_scalar_prefetch=0,
                grid=(g,),
                in_specs=[
                    pl.BlockSpec((bp, H, W), lambda i: (i, 0, 0)),
                    pl.BlockSpec((bp, H, W), lambda i: (i, 0, 0)),
                    # Constant operands: same block every step -> single-buffer.
                    pl.BlockSpec((W, W), lambda i: (0, 0),
                                 pipeline_mode=pl.Buffered(1)),
                    pl.BlockSpec((H, H), lambda i: (0, 0),
                                 pipeline_mode=pl.Buffered(1)),
                ],
                out_specs=pl.BlockSpec((1, 8, 128), lambda i: (i, 0, 0)),
            ),
            compiler_params=pltpu.CompilerParams(
                dimension_semantics=("parallel",),   # independent blocks -> megacore OK
                vmem_limit_bytes=vmem_limit,
            ),
        )(xp, yp, awT, mh)

        # MSELoss mean reduction over the blurred (N, C, H, W) output.
        total = jnp.sum(partials[:, 0, 0])
        return total / jnp.float32(N * C * H * W)

    return loss_fn


# ----------------------------------------------------------------------------
# Pure-JAX reference (same math as the PyTorch module) for correctness check
# ----------------------------------------------------------------------------
def reference_loss(x, y, kernel_size=5, sigma=1.0):
    pad = kernel_size // 2
    w1 = _gaussian_1d(kernel_size, float(sigma))
    w2d = jnp.asarray(np.outer(w1, w1), dtype=jnp.float32)

    def blur(t):
        tp = jnp.pad(t, ((0, 0), (0, 0), (pad, pad), (pad, pad)), mode="reflect")
        Ho, Wo = t.shape[2], t.shape[3]
        out = jnp.zeros(t.shape, jnp.float32)
        for di in range(kernel_size):
            for dj in range(kernel_size):
                out = out + w2d[di, dj] * tp[:, :, di : di + Ho, dj : dj + Wo]
        return out

    d = blur(x.astype(jnp.float32)) - blur(y.astype(jnp.float32))
    return jnp.mean(d * d)


if __name__ == "__main__":
    key = jax.random.PRNGKey(0)
    kx, ky = jax.random.split(key)
    N, C, H, W = 2, 3, 16, 16
    x = jax.random.normal(kx, (N, C, H, W), dtype=jnp.float32)
    y = jax.random.normal(ky, (N, C, H, W), dtype=jnp.float32)

    loss_fn = make_mse_blur_loss(channels=C, kernel_size=5, sigma=1.0)
    loss = jax.block_until_ready(loss_fn(x, y))

    ref = jax.block_until_ready(reference_loss(x, y, kernel_size=5, sigma=1.0))
    # DEFAULT MXU precision (single bf16 pass) => ~1e-3 relative error expected.
    assert np.allclose(np.asarray(loss), np.asarray(ref), rtol=1e-2, atol=1e-4), (
        float(loss),
        float(ref),
    )

    print("KERNEL_OK")
</pallas_src>

<mosaic_0001>
module attributes {stable_mosaic.version = 11 : i64} {
  func.func @_kernel(%arg0: i32, %arg1: memref<3x16x16xf32, #tpu.memory_space<vmem>>, %arg2: memref<3x16x16xf32, #tpu.memory_space<vmem>>, %arg3: memref<16x16xf32, #tpu.memory_space<vmem>>, %arg4: memref<16x16xf32, #tpu.memory_space<vmem>>, %arg5: memref<1x8x128xf32, #tpu.memory_space<vmem>>) attributes {dimension_semantics = [#tpu.dimension_semantics<parallel>], iteration_bounds = array<i64: 2>, scalar_prefetch = 0 : i64, scratch_operands = 0 : i64, tpu.core_type = #tpu.core_type<tc>, window_params = [{transform_indices = @transform_0, window_bounds = array<i64: 3, 16, 16>}, {transform_indices = @transform_1, window_bounds = array<i64: 3, 16, 16>}, {pipeline_mode = #tpu.pipeline_mode<synchronous>, transform_indices = @transform_2, window_bounds = array<i64: 16, 16>}, {pipeline_mode = #tpu.pipeline_mode<synchronous>, transform_indices = @transform_3, window_bounds = array<i64: 16, 16>}, {transform_indices = @transform_4, window_bounds = array<i64: 1, 8, 128>}]} {
    %c0 = arith.constant 0 : index
    %c0_0 = arith.constant 0 : index
    %c0_1 = arith.constant 0 : index
    %0 = vector.load %arg1[%c0, %c0_0, %c0_1] : memref<3x16x16xf32, #tpu.memory_space<vmem>>, vector<3x16x16xf32>
    %c0_2 = arith.constant 0 : index
    %c0_3 = arith.constant 0 : index
    %c0_4 = arith.constant 0 : index
    %1 = vector.load %arg2[%c0_2, %c0_3, %c0_4] : memref<3x16x16xf32, #tpu.memory_space<vmem>>, vector<3x16x16xf32>
    %2 = arith.subf %0, %1 : vector<3x16x16xf32>
    %3 = vector.shape_cast %2 : vector<3x16x16xf32> to vector<48x16xf32>
    %c0_5 = arith.constant 0 : index
    %c0_6 = arith.constant 0 : index
    %4 = vector.load %arg3[%c0_5, %c0_6] : memref<16x16xf32, #tpu.memory_space<vmem>>, vector<16x16xf32>
    %cst = arith.constant dense<0.000000e+00> : vector<48x16xf32>
    %5 = tpu.matmul %3, %4, %cst {dimension_numbers = #tpu.dot_dimension_numbers<[1], [0], [0], [1], [0, 0, 1, 1], [], []>} : vector<48x16xf32>, vector<16x16xf32>, vector<48x16xf32> -> vector<48x16xf32>
    %6 = vector.shape_cast %5 : vector<48x16xf32> to vector<3x16x16xf32>
    "tpu.trace_start"() <{level = 10 : i32, message = "bhw,bgw->bhg"}> : () -> ()
    %cst_7 = arith.constant dense<0.000000e+00> : vector<3x16x16xf32>
    %7 = tpu.matmul %6, %6, %cst_7 {dimension_numbers = #tpu.dot_dimension_numbers<[2], [2], [1], [1], [0, 0, 0, 1, 1, 1], [0], [0]>} : vector<3x16x16xf32>, vector<3x16x16xf32>, vector<3x16x16xf32> -> vector<3x16x16xf32>
    "tpu.trace_stop"() : () -> ()
    %c0_8 = arith.constant 0 : index
    %c0_9 = arith.constant 0 : index
    %8 = vector.load %arg4[%c0_8, %c0_9] : memref<16x16xf32, #tpu.memory_space<vmem>>, vector<16x16xf32>
    %cst_10 = arith.constant dense<0.000000e+00> : vector<16x16xf32>
    %9 = vector.multi_reduction <add>, %7, %cst_10 [0] : vector<3x16x16xf32> to vector<16x16xf32>
    %10 = arith.mulf %8, %9 : vector<16x16xf32>
    %11 = vector.shape_cast %10 : vector<16x16xf32> to vector<1x16x16xf32>
    %cst_11 = arith.constant dense<0.000000e+00> : vector<1xf32>
    %12 = vector.multi_reduction <add>, %11, %cst_11 [1, 2] : vector<1x16x16xf32> to vector<1xf32>
    %13 = vector.shape_cast %12 : vector<1xf32> to vector<1x1x1xf32>
    %14 = vector.extract %13[0, 0, 0] : f32 from vector<1x1x1xf32>
    %15 = vector.broadcast %14 : f32 to vector<1x8x128xf32>
    %c0_12 = arith.constant 0 : index
    %c0_13 = arith.constant 0 : index
    %c0_14 = arith.constant 0 : index
    %16 = vector.load %arg5[%c0_12, %c0_13, %c0_14] : memref<1x8x128xf32, #tpu.memory_space<vmem>>, vector<1x8x128xf32>
    tpu.vector_store %arg5[%c0_12, %c0_13, %c0_14], %15 {strides = array<i32>} : memref<1x8x128xf32, #tpu.memory_space<vmem>>, vector<1x8x128xf32>,
    return
  }
  func.func @transform_0(%arg0: i32) -> (i32, i32, i32) {
    %c0_i32 = arith.constant 0 : i32
    %c0_i32_0 = arith.constant 0 : i32
    %c0_i32_1 = arith.constant 0 : i32
    return %arg0, %c0_i32, %c0_i32_0 : i32, i32, i32
  }
  func.func @transform_1(%arg0: i32) -> (i32, i32, i32) {
    %c0_i32 = arith.constant 0 : i32
    %c0_i32_0 = arith.constant 0 : i32
    %c0_i32_1 = arith.constant 0 : i32
    return %arg0, %c0_i32, %c0_i32_0 : i32, i32, i32
  }
  func.func @transform_2(%arg0: i32) -> (i32, i32) {
    %c0_i32 = arith.constant 0 : i32
    %c0_i32_0 = arith.constant 0 : i32
    %c0_i32_1 = arith.constant 0 : i32
    return %c0_i32, %c0_i32_0 : i32, i32
  }
  func.func @transform_3(%arg0: i32) -> (i32, i32) {
    %c0_i32 = arith.constant 0 : i32
    %c0_i32_0 = arith.constant 0 : i32
    %c0_i32_1 = arith.constant 0 : i32
    return %c0_i32, %c0_i32_0 : i32, i32
  }
  func.func @transform_4(%arg0: i32) -> (i32, i32, i32) {
    %c0_i32 = arith.constant 0 : i32
    %c0_i32_0 = arith.constant 0 : i32
    %c0_i32_1 = arith.constant 0 : i32
    return %arg0, %c0_i32, %c0_i32_0 : i32, i32, i32
  }
}

</mosaic_0001>

<llo_original>
// kernel: tpu_custom_call.1
$region0: #{tpu_custom_call.1}
  #allocation0 [shape = 'u32[]', space=smem, size = 0x4, offset = 0x4, fixed_abs, tag = 'smem constant byte address 0x4 - core index']
  #allocation1 [shape = 'u32[144,128]{1,0:T(1,128)}', space=vmem, size = 0x12000, scoped, tag = 'internal scratch']
  %s0 = inlined_call_operand.hbm [shape: f32[6,16,16], index: 0, kind: input, shape index: {}]
  %s1 = inlined_call_operand.hbm [shape: f32[6,16,16], index: 1, kind: input, shape index: {}]
  %s2 = inlined_call_operand.hbm [shape: f32[16,16], index: 2, kind: input, shape index: {}]
  %s3 = inlined_call_operand.hbm [shape: f32[16,16], index: 3, kind: input, shape index: {}]
  %s4 = inlined_call_operand.hbm [shape: f32[2,8,128], index: 4, kind: output, shape index: {}]
  %s5 = sld [smem:[#allocation0]]
  $region65: #{tpu_custom_call.1} parent=0
    _
  %s7 = ssub.s32 1, %s5
  %s8 = scalar_select 0, %s7, %s5
  $region1: #{tpu_custom_call.1} parent=0
    #allocation2 [shape = 'u8[49152]{0}', space=vmem, size = 0xc000, scoped, tag = 'input window, operand 0']
    #allocation3 [shape = 's32[2]{0}', space=sflag, size = 0x8, scoped, tag = 'scoped memory for tpu_custom_call.1']
    #allocation4 [shape = 's32[2]{0}', space=sflag, size = 0x8, scoped, tag = 'scoped memory for tpu_custom_call.1']
    #allocation5 [shape = 'u8[49152]{0}', space=vmem, size = 0xc000, scoped, tag = 'input window, operand 1']
    #allocation6 [shape = 's32[2]{0}', space=sflag, size = 0x8, scoped, tag = 'scoped memory for tpu_custom_call.1']
    #allocation7 [shape = 'u8[8192]{0}', space=vmem, size = 0x2000, scoped, tag = 'input window, operand 2, single buffered']
    #allocation8 [shape = 'u8[8192]{0}', space=vmem, size = 0x2000, scoped, tag = 'input window, operand 3, single buffered']
    #allocation9 [shape = 's32[1]{0}', space=sflag, size = 0x4, scoped, tag = 'scoped memory for tpu_custom_call.1']
    #allocation10 [shape = 'u8[8192]{0}', space=vmem, size = 0x2000, scoped, tag = 'output window, operand 0']
    %9 = vsyncpa [#allocation3], 0
    %s10 = scalar_lea.sflag [#allocation3], 1
    %11 = vsyncpa %s10, 0
    %12 = vsyncpa [#allocation6], 0
    %s13 = scalar_lea.sflag [#allocation6], 1
    %14 = vsyncpa %s13, 0
    %15 = vsyncpa [#allocation9], 0
    %16 = vsyncpa [#allocation4], 0
    %s17 = scalar_lea.sflag [#allocation4], 1
    %18 = vsyncpa %s17, 0
    loop: start=0, step=1, limit=4
    $region2: #{tpu_custom_call.1} parent=1 // loop_pre_header
      _
    $region3: #{tpu_custom_call.1} parent=1 // loop_header
      %s20 = sphi 0, %s24
      %p21 = scmp.ge.s32.totalorder %s20, 4
      %s30 = sphi 0, %s32
      %s33 = sphi 0, %s30
      %s34 = sphi 0, %s33
      %s50 = sphi 0, %s34
      %s56 = sphi 0, %s58
      %s59 = sphi 0, %s56
      %s60 = sphi 0, %s59
      %s76 = sphi 0, %s60
      %s80 = sphi 0, %s80
      %s82 = sphi 0, %s80
      %s83 = sphi 0, %s82
      %s97 = sphi 0, %s83
      %s101 = sphi 0, %s101
      %s103 = sphi 0, %s101
      %s104 = sphi 0, %s103
      %s118 = sphi 0, %s104
      %s124 = sphi 0, %s126
      %s127 = sphi 0, %s124
      %s128 = sphi 0, %s127
      %s144 = sphi 0, %s128
    $region4: #{tpu_custom_call.1} parent=1 // loop_header_branch
      %23 = sbr.rel (%p21) target = $region8
    $region5: #{tpu_custom_call.1} parent=1 // loop_body
      %s25 = ssub.s32 %s20, 1
      %s26 = ssub.s32 %s20, 2
      %s27 = sadd.s32 %s20, 1
      %s28 = ssub.s32 %s20, %s27
      %p29 = scmp.eq.s32.totalorder %s28, 0
      %s31 = sadd.s32 %s30, 1
      %s32 = scalar_select %p29, %s30, %s31
      %p35 = pneg %p29
      %p36 = scmp.eq.s32.totalorder %s20, 1
      %p37 = por %p35, %p36
      %p38 = scmp.ne.s32.totalorder %s30, %s33
      %p39 = scmp.eq.s32.totalorder %s20, 0
      %p40 = por %p38, %p39
      %p41 = scmp.ne.s32.totalorder %s30, %s33
      %p42 = scmp.eq.s32.totalorder %s25, 1
      %p43 = por %p41, %p42
      %p44 = scmp.ne.s32.totalorder %s33, %s34
      %p45 = scmp.eq.s32.totalorder %s25, 0
      %p46 = por %p44, %p45
      %p47 = scmp.ne.s32.totalorder %s33, %s34
      %p48 = scmp.eq.s32.totalorder %s26, 1
      %p49 = por %p47, %p48
      %p51 = scmp.ne.s32.totalorder %s34, %s50
      %p52 = scmp.eq.s32.totalorder %s26, 0
      %p53 = por %p51, %p52
      %s54 = ssub.s32 %s20, %s27
      %p55 = scmp.eq.s32.totalorder %s54, 0
      %s57 = sadd.s32 %s56, 1
      %s58 = scalar_select %p55, %s56, %s57
      %p61 = pneg %p55
      %p62 = scmp.eq.s32.totalorder %s20, 1
      %p63 = por %p61, %p62
      %p64 = scmp.ne.s32.totalorder %s56, %s59
      %p65 = scmp.eq.s32.totalorder %s20, 0
      %p66 = por %p64, %p65
      %p67 = scmp.ne.s32.totalorder %s56, %s59
      %p68 = scmp.eq.s32.totalorder %s25, 1
      %p69 = por %p67, %p68
      %p70 = scmp.ne.s32.totalorder %s59, %s60
      %p71 = scmp.eq.s32.totalorder %s25, 0
      %p72 = por %p70, %p71
      %p73 = scmp.ne.s32.totalorder %s59, %s60
      %p74 = scmp.eq.s32.totalorder %s26, 1
      %p75 = por %p73, %p74
      %p77 = scmp.ne.s32.totalorder %s60, %s76
      %p78 = scmp.eq.s32.totalorder %s26, 0
      %p79 = por %p77, %p78
      %s81 = sadd.s32 %s80, 1
      %p84 = scmp.eq.s32.totalorder %s20, 1
      %p85 = scmp.ne.s32.totalorder %s80, %s82
      %p86 = scmp.eq.s32.totalorder %s20, 0
      %p87 = por %p85, %p86
      %p88 = scmp.ne.s32.totalorder %s80, %s82
      %p89 = scmp.eq.s32.totalorder %s25, 1
      %p90 = por %p88, %p89
      %p91 = scmp.ne.s32.totalorder %s82, %s83
      %p92 = scmp.eq.s32.totalorder %s25, 0
      %p93 = por %p91, %p92
      %p94 = scmp.ne.s32.totalorder %s82, %s83
      %p95 = scmp.eq.s32.totalorder %s26, 1
      %p96 = por %p94, %p95
      %p98 = scmp.ne.s32.totalorder %s83, %s97
      %p99 = scmp.eq.s32.totalorder %s26, 0
      %p100 = por %p98, %p99
      %s102 = sadd.s32 %s101, 1
      %p105 = scmp.eq.s32.totalorder %s20, 1
      %p106 = scmp.ne.s32.totalorder %s101, %s103
      %p107 = scmp.eq.s32.totalorder %s20, 0
      %p108 = por %p106, %p107
      %p109 = scmp.ne.s32.totalorder %s101, %s103
      %p110 = scmp.eq.s32.totalorder %s25, 1
      %p111 = por %p109, %p110
      %p112 = scmp.ne.s32.totalorder %s103, %s104
      %p113 = scmp.eq.s32.totalorder %s25, 0
      %p114 = por %p112, %p113
      %p115 = scmp.ne.s32.totalorder %s103, %s104
      %p116 = scmp.eq.s32.totalorder %s26, 1
      %p117 = por %p115, %p116
      %p119 = scmp.ne.s32.totalorder %s104, %s118
      %p120 = scmp.eq.s32.totalorder %s26, 0
      %p121 = por %p119, %p120
      %s122 = ssub.s32 %s20, %s27
      %p123 = scmp.eq.s32.totalorder %s122, 0
      %s125 = sadd.s32 %s124, 1
      %s126 = scalar_select %p123, %s124, %s125
      %p129 = pneg %p123
      %p130 = scmp.eq.s32.totalorder %s20, 1
      %p131 = por %p129, %p130
      %p132 = scmp.ne.s32.totalorder %s124, %s127
      %p133 = scmp.eq.s32.totalorder %s20, 0
      %p134 = por %p132, %p133
      %p135 = scmp.ne.s32.totalorder %s124, %s127
      %p136 = scmp.eq.s32.totalorder %s25, 1
      %p137 = por %p135, %p136
      %p138 = scmp.ne.s32.totalorder %s127, %s128
      %p139 = scmp.eq.s32.totalorder %s25, 0
      %p140 = por %p138, %p139
      %p141 = scmp.ne.s32.totalorder %s127, %s128
      %p142 = scmp.eq.s32.totalorder %s26, 1
      %p143 = por %p141, %p142
      %p145 = scmp.ne.s32.totalorder %s128, %s144
      %p146 = scmp.eq.s32.totalorder %s26, 0
      %p147 = por %p145, %p146
      %p148 = scmp.le.s32.totalorder 1, %s20
      %p149 = scmp.lt.s32.totalorder %s20, 3
      %p150 = pnand %p148, %p149
      %p151 = pneg %p150
      // Predicated region
      $region9: #{tpu_custom_call.1} parent=5 // pred_check
        _
      $region10: #{tpu_custom_call.1} parent=5 // pred_check_branch
        %153 = sbr.rel (%p150) target = $region12
      $region11: #{tpu_custom_call.1} parent=5 // pred_region
        %s154 = ssub.s32 %s20, 1
        // Predicated region
        $region13: #{tpu_custom_call.1} parent=11 // pred_check
          %p155 = pneg %p93
        $region14: #{tpu_custom_call.1} parent=11 // pred_check_branch
          %157 = sbr.rel (%p155) target = $region16
        $region15: #{tpu_custom_call.1} parent=11 // pred_region
          %s159 = ssub.s32 256, 256
          %160 = vsyncadd [#allocation6], %s159
          %s161 = sshll.u32 [#allocation7], 4
          %s162 = int_to_ptr.vmem [resolvable:$true] %s161
          %167 = dma.hbm_to_vmem [thread:$0]  %s2, 256, %s162, [#allocation6], 128, 128, 8
        $region16: #{tpu_custom_call.1} parent=11 // pred_fallthru
          _
        // Predicated region
        $region17: #{tpu_custom_call.1} parent=11 // pred_check
          %p168 = pneg %p114
        $region18: #{tpu_custom_call.1} parent=11 // pred_check_branch
          %170 = sbr.rel (%p168) target = $region20
        $region19: #{tpu_custom_call.1} parent=11 // pred_region
          %s172 = ssub.s32 256, 256
          %173 = vsyncadd [#allocation9], %s172
          %s174 = sshll.u32 [#allocation8], 4
          %s175 = int_to_ptr.vmem [resolvable:$true] %s174
          %180 = dma.hbm_to_vmem [thread:$0]  %s3, 256, %s175, [#allocation9], 128, 128, 8
        $region20: #{tpu_custom_call.1} parent=11 // pred_fallthru
          _
      $region12: #{tpu_custom_call.1} parent=5 // pred_fallthru
        _
      %p181 = scmp.lt.s32.totalorder %s20, 2
      // Predicated region
      $region21: #{tpu_custom_call.1} parent=5 // pred_check
        %p182 = pneg %p181
      $region22: #{tpu_custom_call.1} parent=5 // pred_check_branch
        %184 = sbr.rel (%p182) target = $region24
      $region23: #{tpu_custom_call.1} parent=5 // pred_region
        // Predicated region
        $region25: #{tpu_custom_call.1} parent=23 // pred_check
          %p185 = pneg %p40
        $region26: #{tpu_custom_call.1} parent=23 // pred_check_branch
          %187 = sbr.rel (%p185) target = $region28
        $region27: #{tpu_custom_call.1} parent=23 // pred_region
          %s188 = sand.u32 %s30, 1
          %s189 = scalar_lea.sflag [#allocation3], %s188
          %s190 = sand.u32 %s30, 1
          %s191 = smul.addr %s190, 48
          %s192 = scalar_lea.vmem [#allocation2], %s191
          %s193 = smul.u32 3, %s20
          %s195 = ssub.s32 768, 768
          %196 = vsyncadd %s189, %s195
          %s197 = smul.addr %s193, 2
          %s198 = smul.addr %s197, 128
          %s199 = scalar_lea.hbm %s0, %s198
          %s200 = sshll.u32 %s192, 4
          %s201 = int_to_ptr.vmem [resolvable:$true] %s200
          %206 = dma.hbm_to_vmem [thread:$0]  %s199, 768, %s201, %s189, 128, 128, 8
        $region28: #{tpu_custom_call.1} parent=23 // pred_fallthru
          _
        // Predicated region
        $region29: #{tpu_custom_call.1} parent=23 // pred_check
          %p207 = pneg %p66
        $region30: #{tpu_custom_call.1} parent=23 // pred_check_branch
          %209 = sbr.rel (%p207) target = $region32
        $region31: #{tpu_custom_call.1} parent=23 // pred_region
          %s210 = sand.u32 %s20, 1
          %s211 = scalar_lea.sflag [#allocation6], %s210
          %s212 = sand.u32 %s56, 1
          %s213 = smul.addr %s212, 48
          %s214 = scalar_lea.vmem [#allocation5], %s213
          %s215 = smul.u32 3, %s20
          %s217 = ssub.s32 768, 768
          %218 = vsyncadd %s211, %s217
          %s219 = smul.addr %s215, 2
          %s220 = smul.addr %s219, 128
          %s221 = scalar_lea.hbm %s1, %s220
          %s222 = sshll.u32 %s214, 4
          %s223 = int_to_ptr.vmem [resolvable:$true] %s222
          %228 = dma.hbm_to_vmem [thread:$0]  %s221, 768, %s223, %s211, 128, 128, 8
        $region32: #{tpu_custom_call.1} parent=23 // pred_fallthru
          _
      $region24: #{tpu_custom_call.1} parent=5 // pred_fallthru
        _
      %p229 = scmp.le.s32.totalorder 1, %s20
      %p230 = scmp.lt.s32.totalorder %s20, 3
      %p231 = pnand %p229, %p230
      %p232 = pneg %p231
      // Predicated region
      $region33: #{tpu_custom_call.1} parent=5 // pred_check
        _
      $region34: #{tpu_custom_call.1} parent=5 // pred_check_branch
        %234 = sbr.rel (%p231) target = $region36
      $region35: #{tpu_custom_call.1} parent=5 // pred_region
        %s235 = ssub.s32 %s20, 1
        %s236 = sand.u32 %s33, 1
        %s237 = scalar_lea.sflag [#allocation3], %s236
        %s238 = sand.u32 %s33, 1
        %s239 = smul.addr %s238, 48
        %s240 = scalar_lea.vmem [#allocation2], %s239
        // Predicated region
        $region37: #{tpu_custom_call.1} parent=35 // pred_check
          %p241 = pneg %p46
        $region38: #{tpu_custom_call.1} parent=35 // pred_check_branch
          %243 = sbr.rel (%p241) target = $region40
        $region39: #{tpu_custom_call.1} parent=35 // pred_region
          %244 = dma.done %s237, 768
        $region40: #{tpu_custom_call.1} parent=35 // pred_fallthru
          _
        %s245 = sand.u32 %s25, 1
        %s246 = scalar_lea.sflag [#allocation6], %s245
        %s247 = sand.u32 %s59, 1
        %s248 = smul.addr %s247, 48
        %s249 = scalar_lea.vmem [#allocation5], %s248
        // Predicated region
        $region41: #{tpu_custom_call.1} parent=35 // pred_check
          %p250 = pneg %p72
        $region42: #{tpu_custom_call.1} parent=35 // pred_check_branch
          %252 = sbr.rel (%p250) target = $region44
        $region43: #{tpu_custom_call.1} parent=35 // pred_region
          %253 = dma.done %s246, 768
        $region44: #{tpu_custom_call.1} parent=35 // pred_fallthru
          _
        // Predicated region
        $region45: #{tpu_custom_call.1} parent=35 // pred_check
          %p254 = pneg %p93
        $region46: #{tpu_custom_call.1} parent=35 // pred_check_branch
          %256 = sbr.rel (%p254) target = $region48
        $region47: #{tpu_custom_call.1} parent=35 // pred_region
          %257 = dma.done [#allocation6], 256
        $region48: #{tpu_custom_call.1} parent=35 // pred_fallthru
          _
        // Predicated region
        $region49: #{tpu_custom_call.1} parent=35 // pred_check
          %p258 = pneg %p114
        $region50: #{tpu_custom_call.1} parent=35 // pred_check_branch
          %260 = sbr.rel (%p258) target = $region52
        $region51: #{tpu_custom_call.1} parent=35 // pred_region
          %261 = dma.done [#allocation9], 256
        $region52: #{tpu_custom_call.1} parent=35 // pred_fallthru
          _
        %s262 = sand.u32 %s33, 1
        %s263 = scalar_lea.sflag [#allocation3], %s262
        %s264 = sand.u32 %s33, 1
        %s265 = smul.addr %s264, 48
        %s266 = scalar_lea.vmem [#allocation2], %s265
        %p267 = pneg %p46
        %p268 = pneg %p43
        %s269 = sand.u32 %s25, 1
        %s270 = scalar_lea.sflag [#allocation6], %s269
        %s271 = sand.u32 %s59, 1
        %s272 = smul.addr %s271, 48
        %s273 = scalar_lea.vmem [#allocation5], %s272
        %p274 = pneg %p72
        %p275 = pneg %p69
        %p276 = pneg %p93
        %p277 = pneg %p90
        %p278 = pneg %p114
        %p279 = pneg %p111
        %p280 = pneg %p140
        %p281 = pneg %p137
        %s282 = sand.u32 %s127, 1
        %s283 = scalar_lea.sflag [#allocation4], %s282
        %s284 = sand.u32 %s127, 1
        %s285 = smul.addr %s284, 8
        %s286 = scalar_lea.vmem [#allocation10], %s285
        %s287 = smul.u32 3, %s25
        %s288 = smul.u32 3, %s25
        %v289 = vld [vmem:[%s240] sm:$0xff]
        %v290 = vld [vmem:[%s240 + $0x8] sm:$0xff]
        %v291 = vld [vmem:[%s240 + $0x10] sm:$0xff]
        %v292 = vld [vmem:[%s240 + $0x18] sm:$0xff]
        %v293 = vld [vmem:[%s240 + $0x20] sm:$0xff]
        %v294 = vld [vmem:[%s240 + $0x28] sm:$0xff]
        %v295 = vld [vmem:[%s249] sm:$0xff]
        %v296 = vld [vmem:[%s249 + $0x8] sm:$0xff]
        %v297 = vld [vmem:[%s249 + $0x10] sm:$0xff]
        %v298 = vld [vmem:[%s249 + $0x18] sm:$0xff]
        %v299 = vld [vmem:[%s249 + $0x20] sm:$0xff]
        %v300 = vld [vmem:[%s249 + $0x28] sm:$0xff]
        %v301 = vsub.f32 %v289, %v295
        %v302 = vsub.f32 %v290, %v296
        %v303 = vsub.f32 %v291, %v297
        %v304 = vsub.f32 %v292, %v298
        %v305 = vsub.f32 %v293, %v299
        %v306 = vsub.f32 %v294, %v300
        %v307 = vld [vmem:[#allocation7] sm:$0xff]
        %v308 = vld [vmem:[#allocation7 + $0x8] sm:$0xff]
        %vm309 = vcmask 130048
        %v311 = vsel %vm309, %v301, 0
        %v314 = vsel %vm309, %v302, 0
        %v317 = vsel %vm309, %v303, 0
        %v320 = vsel %vm309, %v304, 0
        %v323 = vsel %vm309, %v305, 0
        %v326 = vsel %vm309, %v306, 0
        %328 = vmatprep.subr.mxu0 0.0
        %329 = vmatpush1.msra.mxu0 %v307
        %330 = vmatprep.subr.mxu0 0.0
        %331 = vmatpush1.msra.mxu0 %v308
        %332 = vmatprep.subr.mxu0 0.0
        %333 = vmatpush1.msra.mxu0 0.0
        %334 = vmatprep.subr.mxu0 0.0
        %335 = vmatpush1.msra.mxu0 0.0
        %336 = vmatprep.subr.mxu0 0.0
        %337 = vmatpush1.msra.mxu0 0.0
        %338 = vmatprep.subr.mxu0 0.0
        %339 = vmatpush1.msra.mxu0 0.0
        %340 = vmatprep.subr.mxu0 0.0
        %341 = vmatpush1.msra.mxu0 0.0
        %342 = vmatprep.subr.mxu0 0.0
        %343 = vmatpush1.msra.mxu0 0.0
        %344 = vmatprep.subr.mxu0 0.0
        %345 = vmatpush1.msra.mxu0 0.0
        %346 = vmatprep.subr.mxu0 0.0
        %347 = vmatpush1.msra.mxu0 0.0
        %348 = vmatprep.subr.mxu0 0.0
        %349 = vmatpush1.msra.mxu0 0.0
        %350 = vmatprep.subr.mxu0 0.0
        %351 = vmatpush1.msra.mxu0 0.0
        %352 = vmatprep.subr.mxu0 0.0
        %353 = vmatpush1.msra.mxu0 0.0
        %354 = vmatprep.subr.mxu0 0.0
        %355 = vmatpush1.msra.mxu0 0.0
        %356 = vmatprep.subr.mxu0 0.0
        %357 = vmatpush1.msra.mxu0 0.0
        %358 = vmatprep.subr.mxu0 0.0
        %359 = vmatpush1.msra.mxu0 0.0
        %360 = vmatprep.subr.mxu0 0.0
        %361 = vmatpush1.msra.mxu0 0.0
        %362 = vmatprep.subr.mxu0 0.0
        %363 = vmatpush1.msra.mxu0 0.0
        %364 = vmatprep.subr.mxu0 0.0
        %365 = vmatpush1.msra.mxu0 0.0
        %366 = vmatprep.subr.mxu0 0.0
        %367 = vmatpush1.msra.mxu0 0.0
        %368 = vmatprep.subr.mxu0 0.0
        %369 = vmatpush1.msra.mxu0 0.0
        %370 = vmatprep.subr.mxu0 0.0
        %371 = vmatpush1.msra.mxu0 0.0
        %372 = vmatprep.subr.mxu0 0.0
        %373 = vmatpush1.msra.mxu0 0.0
        %374 = vmatprep.subr.mxu0 0.0
        %375 = vmatpush1.msra.mxu0 0.0
        %376 = vmatprep.subr.mxu0 0.0
        %377 = vmatpush1.msra.mxu0 0.0
        %378 = vmatprep.subr.mxu0 0.0
        %379 = vmatpush1.msra.mxu0 0.0
        %380 = vmatprep.subr.mxu0 0.0
        %381 = vmatpush1.msra.mxu0 0.0
        %382 = vmatprep.subr.mxu0 0.0
        %383 = vmatpush1.msra.mxu0 0.0
        %384 = vmatprep.subr.mxu0 0.0
        %385 = vmatpush1.msra.mxu0 0.0
        %386 = vmatprep.subr.mxu0 0.0
        %387 = vmatpush1.msra.mxu0 0.0
        %388 = vmatprep.subr.mxu0 0.0
        %389 = vmatpush1.msra.mxu0 0.0
        %390 = vmatprep.subr.mxu0 0.0
        %391 = vmatpush1.msra.mxu0 0.0
        %392 = vmatprep.mubr.f32.mxu0 0.0
        %393 = vmatmul.mubr.f32.gmra.mrb[0].mxu0 %v311
        %v394 = vpop.f32.mrb[0].mxu0
        %v395 = vadd.f32 0.0, %v394
        %v396 = vpop.f32.mrb[0].mxu0
        %397 = vmatprep.mubr.f32.mxu0 0.0
        %398 = vmatmul.mubr.f32.gmra.mrb[0].mxu0 %v314
        %v399 = vpop.f32.mrb[0].mxu0
        %v400 = vadd.f32 0.0, %v399
        %v401 = vpop.f32.mrb[0].mxu0
        %402 = vmatprep.mubr.f32.mxu0 0.0
        %403 = vmatmul.mubr.f32.gmra.mrb[0].mxu0 %v317
        %v404 = vpop.f32.mrb[0].mxu0
        %v405 = vadd.f32 0.0, %v404
        %v406 = vpop.f32.mrb[0].mxu0
        %407 = vmatprep.mubr.f32.mxu0 0.0
        %408 = vmatmul.mubr.f32.gmra.mrb[0].mxu0 %v320
        %v409 = vpop.f32.mrb[0].mxu0
        %v410 = vadd.f32 0.0, %v409
        %v411 = vpop.f32.mrb[0].mxu0
        %412 = vmatprep.mubr.f32.mxu0 0.0
        %413 = vmatmul.mubr.f32.gmra.mrb[0].mxu0 %v323
        %v414 = vpop.f32.mrb[0].mxu0
        %v415 = vadd.f32 0.0, %v414
        %v416 = vpop.f32.mrb[0].mxu0
        %417 = vmatprep.mubr.f32.mxu0 0.0
        %418 = vmatmul.mubr.f32.gmra.mrb[0].mxu0 %v326
        %v419 = vpop.f32.mrb[0].mxu0
        %v420 = vadd.f32 0.0, %v419
        %v421 = vpop.f32.mrb[0].mxu0
        %422 = vdwg.mxu0
        %v424 = vsel %vm309, %v395, 0
        %v427 = vsel %vm309, %v400, 0
        %429 = vmatprep.subr.mxu0 0.0
        %430 = vmatpush1.xpose.msra.mxu0 %v424
        %431 = vmatprep.subr.mxu0 0.0
        %432 = vmatpush1.xpose.msra.mxu0 %v427
        %433 = vmatprep.subr.mxu0 0.0
        %434 = vmatpush1.xpose.msra.mxu0 0.0
        %435 = vmatprep.subr.mxu0 0.0
        %436 = vmatpush1.xpose.msra.mxu0 0.0
        %437 = vmatprep.subr.mxu0 0.0
        %438 = vmatpush1.xpose.msra.mxu0 0.0
        %439 = vmatprep.subr.mxu0 0.0
        %440 = vmatpush1.xpose.msra.mxu0 0.0
        %441 = vmatprep.subr.mxu0 0.0
        %442 = vmatpush1.xpose.msra.mxu0 0.0
        %443 = vmatprep.subr.mxu0 0.0
        %444 = vmatpush1.xpose.msra.mxu0 0.0
        %445 = vmatprep.subr.mxu0 0.0
        %446 = vmatpush1.xpose.msra.mxu0 0.0
        %447 = vmatprep.subr.mxu0 0.0
        %448 = vmatpush1.xpose.msra.mxu0 0.0
        %449 = vmatprep.subr.mxu0 0.0
        %450 = vmatpush1.xpose.msra.mxu0 0.0
        %451 = vmatprep.subr.mxu0 0.0
        %452 = vmatpush1.xpose.msra.mxu0 0.0
        %453 = vmatprep.subr.mxu0 0.0
        %454 = vmatpush1.xpose.msra.mxu0 0.0
        %455 = vmatprep.subr.mxu0 0.0
        %456 = vmatpush1.xpose.msra.mxu0 0.0
        %457 = vmatprep.subr.mxu0 0.0
        %458 = vmatpush1.xpose.msra.mxu0 0.0
        %459 = vmatprep.subr.mxu0 0.0
        %460 = vmatpush1.xpose.msra.mxu0 0.0
        %461 = vmatprep.subr.mxu0 0.0
        %462 = vmatpush1.xpose.msra.mxu0 0.0
        %463 = vmatprep.subr.mxu0 0.0
        %464 = vmatpush1.xpose.msra.mxu0 0.0
        %465 = vmatprep.subr.mxu0 0.0
        %466 = vmatpush1.xpose.msra.mxu0 0.0
        %467 = vmatprep.subr.mxu0 0.0
        %468 = vmatpush1.xpose.msra.mxu0 0.0
        %469 = vmatprep.subr.mxu0 0.0
        %470 = vmatpush1.xpose.msra.mxu0 0.0
        %471 = vmatprep.subr.mxu0 0.0
        %472 = vmatpush1.xpose.msra.mxu0 0.0
        %473 = vmatprep.subr.mxu0 0.0
        %474 = vmatpush1.xpose.msra.mxu0 0.0
        %475 = vmatprep.subr.mxu0 0.0
        %476 = vmatpush1.xpose.msra.mxu0 0.0
        %477 = vmatprep.subr.mxu0 0.0
        %478 = vmatpush1.xpose.msra.mxu0 0.0
        %479 = vmatprep.subr.mxu0 0.0
        %480 = vmatpush1.xpose.msra.mxu0 0.0
        %481 = vmatprep.subr.mxu0 0.0
        %482 = vmatpush1.xpose.msra.mxu0 0.0
        %483 = vmatprep.subr.mxu0 0.0
        %484 = vmatpush1.xpose.msra.mxu0 0.0
        %485 = vmatprep.subr.mxu0 0.0
        %486 = vmatpush1.xpose.msra.mxu0 0.0
        %487 = vmatprep.subr.mxu0 0.0
        %488 = vmatpush1.xpose.msra.mxu0 0.0
        %489 = vmatprep.subr.mxu0 0.0
        %490 = vmatpush1.xpose.msra.mxu0 0.0
        %491 = vmatprep.subr.mxu0 0.0
        %492 = vmatpush1.xpose.msra.mxu0 0.0
        %493 = vmatprep.mubr.f32.mxu0 0.0
        %494 = vmatmul.mubr.f32.gmra.mrb[0].mxu0 %v424
        %v495 = vpop.f32.mrb[0].mxu0
        %v496 = vadd.f32 0.0, %v495
        %v497 = vpop.f32.mrb[0].mxu0
        %498 = vmatprep.mubr.f32.mxu0 0.0
        %499 = vmatmul.mubr.f32.gmra.mrb[0].mxu0 %v427
        %v500 = vpop.f32.mrb[0].mxu0
        %v501 = vadd.f32 0.0, %v500
        %v502 = vpop.f32.mrb[0].mxu0
        %503 = vdwg.mxu0
        %v505 = vsel %vm309, %v405, 0
        %v508 = vsel %vm309, %v410, 0
        %510 = vmatprep.subr.mxu0 0.0
        %511 = vmatpush1.xpose.msra.mxu0 %v505
        %512 = vmatprep.subr.mxu0 0.0
        %513 = vmatpush1.xpose.msra.mxu0 %v508
        %514 = vmatprep.subr.mxu0 0.0
        %515 = vmatpush1.xpose.msra.mxu0 0.0
        %516 = vmatprep.subr.mxu0 0.0
        %517 = vmatpush1.xpose.msra.mxu0 0.0
        %518 = vmatprep.subr.mxu0 0.0
        %519 = vmatpush1.xpose.msra.mxu0 0.0
        %520 = vmatprep.subr.mxu0 0.0
        %521 = vmatpush1.xpose.msra.mxu0 0.0
        %522 = vmatprep.subr.mxu0 0.0
        %523 = vmatpush1.xpose.msra.mxu0 0.0
        %524 = vmatprep.subr.mxu0 0.0
        %525 = vmatpush1.xpose.msra.mxu0 0.0
        %526 = vmatprep.subr.mxu0 0.0
        %527 = vmatpush1.xpose.msra.mxu0 0.0
        %528 = vmatprep.subr.mxu0 0.0
        %529 = vmatpush1.xpose.msra.mxu0 0.0
        %530 = vmatprep.subr.mxu0 0.0
        %531 = vmatpush1.xpose.msra.mxu0 0.0
        %532 = vmatprep.subr.mxu0 0.0
        %533 = vmatpush1.xpose.msra.mxu0 0.0
        %534 = vmatprep.subr.mxu0 0.0
        %535 = vmatpush1.xpose.msra.mxu0 0.0
        %536 = vmatprep.subr.mxu0 0.0
        %537 = vmatpush1.xpose.msra.mxu0 0.0
        %538 = vmatprep.subr.mxu0 0.0
        %539 = vmatpush1.xpose.msra.mxu0 0.0
        %540 = vmatprep.subr.mxu0 0.0
        %541 = vmatpush1.xpose.msra.mxu0 0.0
        %542 = vmatprep.subr.mxu0 0.0
        %543 = vmatpush1.xpose.msra.mxu0 0.0
        %544 = vmatprep.subr.mxu0 0.0
        %545 = vmatpush1.xpose.msra.mxu0 0.0
        %546 = vmatprep.subr.mxu0 0.0
        %547 = vmatpush1.xpose.msra.mxu0 0.0
        %548 = vmatprep.subr.mxu0 0.0
        %549 = vmatpush1.xpose.msra.mxu0 0.0
        %550 = vmatprep.subr.mxu0 0.0
        %551 = vmatpush1.xpose.msra.mxu0 0.0
        %552 = vmatprep.subr.mxu0 0.0
        %553 = vmatpush1.xpose.msra.mxu0 0.0
        %554 = vmatprep.subr.mxu0 0.0
        %555 = vmatpush1.xpose.msra.mxu0 0.0
        %556 = vmatprep.subr.mxu0 0.0
        %557 = vmatpush1.xpose.msra.mxu0 0.0
        %558 = vmatprep.subr.mxu0 0.0
        %559 = vmatpush1.xpose.msra.mxu0 0.0
        %560 = vmatprep.subr.mxu0 0.0
        %561 = vmatpush1.xpose.msra.mxu0 0.0
        %562 = vmatprep.subr.mxu0 0.0
        %563 = vmatpush1.xpose.msra.mxu0 0.0
        %564 = vmatprep.subr.mxu0 0.0
        %565 = vmatpush1.xpose.msra.mxu0 0.0
        %566 = vmatprep.subr.mxu0 0.0
        %567 = vmatpush1.xpose.msra.mxu0 0.0
        %568 = vmatprep.subr.mxu0 0.0
        %569 = vmatpush1.xpose.msra.mxu0 0.0
        %570 = vmatprep.subr.mxu0 0.0
        %571 = vmatpush1.xpose.msra.mxu0 0.0
        %572 = vmatprep.subr.mxu0 0.0
        %573 = vmatpush1.xpose.msra.mxu0 0.0
        %574 = vmatprep.mubr.f32.mxu0 0.0
        %575 = vmatmul.mubr.f32.gmra.mrb[0].mxu0 %v505
        %v576 = vpop.f32.mrb[0].mxu0
        %v577 = vadd.f32 0.0, %v576
        %v578 = vpop.f32.mrb[0].mxu0
        %579 = vmatprep.mubr.f32.mxu0 0.0
        %580 = vmatmul.mubr.f32.gmra.mrb[0].mxu0 %v508
        %v581 = vpop.f32.mrb[0].mxu0
        %v582 = vadd.f32 0.0, %v581
        %v583 = vpop.f32.mrb[0].mxu0
        %584 = vdwg.mxu0
        %v586 = vsel %vm309, %v415, 0
        %v589 = vsel %vm309, %v420, 0
        %591 = vmatprep.subr.mxu0 0.0
        %592 = vmatpush1.xpose.msra.mxu0 %v586
        %593 = vmatprep.subr.mxu0 0.0
        %594 = vmatpush1.xpose.msra.mxu0 %v589
        %595 = vmatprep.subr.mxu0 0.0
        %596 = vmatpush1.xpose.msra.mxu0 0.0
        %597 = vmatprep.subr.mxu0 0.0
        %598 = vmatpush1.xpose.msra.mxu0 0.0
        %599 = vmatprep.subr.mxu0 0.0
        %600 = vmatpush1.xpose.msra.mxu0 0.0
        %601 = vmatprep.subr.mxu0 0.0
        %602 = vmatpush1.xpose.msra.mxu0 0.0
        %603 = vmatprep.subr.mxu0 0.0
        %604 = vmatpush1.xpose.msra.mxu0 0.0
        %605 = vmatprep.subr.mxu0 0.0
        %606 = vmatpush1.xpose.msra.mxu0 0.0
        %607 = vmatprep.subr.mxu0 0.0
        %608 = vmatpush1.xpose.msra.mxu0 0.0
        %609 = vmatprep.subr.mxu0 0.0
        %610 = vmatpush1.xpose.msra.mxu0 0.0
        %611 = vmatprep.subr.mxu0 0.0
        %612 = vmatpush1.xpose.msra.mxu0 0.0
        %613 = vmatprep.subr.mxu0 0.0
        %614 = vmatpush1.xpose.msra.mxu0 0.0
        %615 = vmatprep.subr.mxu0 0.0
        %616 = vmatpush1.xpose.msra.mxu0 0.0
        %617 = vmatprep.subr.mxu0 0.0
        %618 = vmatpush1.xpose.msra.mxu0 0.0
        %619 = vmatprep.subr.mxu0 0.0
        %620 = vmatpush1.xpose.msra.mxu0 0.0
        %621 = vmatprep.subr.mxu0 0.0
        %622 = vmatpush1.xpose.msra.mxu0 0.0
        %623 = vmatprep.subr.mxu0 0.0
        %624 = vmatpush1.xpose.msra.mxu0 0.0
        %625 = vmatprep.subr.mxu0 0.0
        %626 = vmatpush1.xpose.msra.mxu0 0.0
        %627 = vmatprep.subr.mxu0 0.0
        %628 = vmatpush1.xpose.msra.mxu0 0.0
        %629 = vmatprep.subr.mxu0 0.0
        %630 = vmatpush1.xpose.msra.mxu0 0.0
        %631 = vmatprep.subr.mxu0 0.0
        %632 = vmatpush1.xpose.msra.mxu0 0.0
        %633 = vmatprep.subr.mxu0 0.0
        %634 = vmatpush1.xpose.msra.mxu0 0.0
        %635 = vmatprep.subr.mxu0 0.0
        %636 = vmatpush1.xpose.msra.mxu0 0.0
        %637 = vmatprep.subr.mxu0 0.0
        %638 = vmatpush1.xpose.msra.mxu0 0.0
        %639 = vmatprep.subr.mxu0 0.0
        %640 = vmatpush1.xpose.msra.mxu0 0.0
        %641 = vmatprep.subr.mxu0 0.0
        %642 = vmatpush1.xpose.msra.mxu0 0.0
        %643 = vmatprep.subr.mxu0 0.0
        %644 = vmatpush1.xpose.msra.mxu0 0.0
        %645 = vmatprep.subr.mxu0 0.0
        %646 = vmatpush1.xpose.msra.mxu0 0.0
        %647 = vmatprep.subr.mxu0 0.0
        %648 = vmatpush1.xpose.msra.mxu0 0.0
        %649 = vmatprep.subr.mxu0 0.0
        %650 = vmatpush1.xpose.msra.mxu0 0.0
        %651 = vmatprep.subr.mxu0 0.0
        %652 = vmatpush1.xpose.msra.mxu0 0.0
        %653 = vmatprep.subr.mxu0 0.0
        %654 = vmatpush1.xpose.msra.mxu0 0.0
        %655 = vmatprep.mubr.f32.mxu0 0.0
        %656 = vmatmul.mubr.f32.gmra.mrb[0].mxu0 %v586
        %v657 = vpop.f32.mrb[0].mxu0
        %v658 = vadd.f32 0.0, %v657
        %v659 = vpop.f32.mrb[0].mxu0
        %660 = vmatprep.mubr.f32.mxu0 0.0
        %661 = vmatmul.mubr.f32.gmra.mrb[0].mxu0 %v589
        %v662 = vpop.f32.mrb[0].mxu0
        %v663 = vadd.f32 0.0, %v662
        %v664 = vpop.f32.mrb[0].mxu0
        %665 = vdwg.mxu0
        %v666 = vld [vmem:[#allocation8] sm:$0xff]
        %v667 = vld [vmem:[#allocation8 + $0x8] sm:$0xff]
        %v668 = vsel %vm309, %v496, 0.0
        %v669 = vsel %vm309, %v577, 0.0
        %v670 = vadd.f32 %v668, %v669
        %v671 = vsel %vm309, %v658, 0.0
        %v672 = vadd.f32 %v670, %v671
        %v673 = vsel %vm309, %v501, 0.0
        %v674 = vsel %vm309, %v582, 0.0
        %v675 = vadd.f32 %v673, %v674
        %v676 = vsel %vm309, %v663, 0.0
        %v677 = vadd.f32 %v675, %v676
        %v678 = vmul.f32 %v666, %v672
        %v679 = vmul.f32 %v667, %v677
        %v680 = vsel %vm309, %v678, 0.0
        %v681 = vsel %vm309, %v679, 0.0
        %v682 = vadd.f32 %v680, %v681
        %683 = vadd.xlane.f32.xlu0 %v682
        %v684 = vpop.xlane.xlu0 %683
        %v685 = vrot.slane %v684, 4
        %v686 = vadd.f32 %v684, %v685
        %v687 = vrot.slane %v686, 2
        %v688 = vadd.f32 %v686, %v687
        %v689 = vrot.slane %v688, 1
        %v690 = vadd.f32 %v688, %v689
        %s691 = vtos %v690
        %v692 = vstv %s691
        %693 = vst [vmem:[%s286] sm:$0xff] %v692
        %s694 = sand.u32 %s127, 1
        %s695 = scalar_lea.sflag [#allocation4], %s694
        %s696 = sand.u32 %s127, 1
        %s697 = smul.addr %s696, 8
        %s698 = scalar_lea.vmem [#allocation10], %s697
        // Predicated region
        $region53: #{tpu_custom_call.1} parent=35 // pred_check
          %p699 = pneg %p137
        $region54: #{tpu_custom_call.1} parent=35 // pred_check_branch
          %701 = sbr.rel (%p699) target = $region56
        $region55: #{tpu_custom_call.1} parent=35 // pred_region
          %s703 = ssub.s32 128, 128
          %704 = vsyncadd %s695, %s703
          %s705 = smul.addr %s25, 128
          %s706 = scalar_lea.hbm %s4, %s705
          %s708 = sshll.u32 %s698, 4
          %s709 = int_to_ptr.vmem [resolvable:$true] %s708
          %711 = dma.vmem_to_hbm [thread:$0]  %s709, 128, %s706, %s695
        $region56: #{tpu_custom_call.1} parent=35 // pred_fallthru
          _
      $region36: #{tpu_custom_call.1} parent=5 // pred_fallthru
        _
      %p712 = scmp.le.s32.totalorder 2, %s20
      // Predicated region
      $region57: #{tpu_custom_call.1} parent=5 // pred_check
        %p713 = pneg %p712
      $region58: #{tpu_custom_call.1} parent=5 // pred_check_branch
        %715 = sbr.rel (%p713) target = $region60
      $region59: #{tpu_custom_call.1} parent=5 // pred_region
        %s716 = ssub.s32 %s20, 2
        // Predicated region
        $region61: #{tpu_custom_call.1} parent=59 // pred_check
          %p717 = pneg %p143
        $region62: #{tpu_custom_call.1} parent=59 // pred_check_branch
          %719 = sbr.rel (%p717) target = $region64
        $region63: #{tpu_custom_call.1} parent=59 // pred_region
          %s720 = sand.u32 %s128, 1
          %s721 = scalar_lea.sflag [#allocation4], %s720
          %s722 = sand.u32 %s128, 1
          %s723 = smul.addr %s722, 8
          %s724 = scalar_lea.vmem [#allocation10], %s723
          %725 = dma.done %s721, 128
        $region64: #{tpu_custom_call.1} parent=59 // pred_fallthru
          _
      $region60: #{tpu_custom_call.1} parent=5 // pred_fallthru
        _
    $region6: #{tpu_custom_call.1} parent=1 // loop_footer
      %s24 = sadd.s32 1, %s20
    $region7: #{tpu_custom_call.1} parent=1 // loop_footer_branch
      %19 = sbr.rel target = $region3
    $region8: #{tpu_custom_call.1} parent=1 // loop_exit
      _
    %726 = vsyncpa [#allocation3], 1
    %s727 = scalar_lea.sflag [#allocation3], 1
    %728 = vsyncpa %s727, 1
    %729 = vsyncpa [#allocation6], 1
    %s730 = scalar_lea.sflag [#allocation6], 1
    %731 = vsyncpa %s730, 1
    %732 = vsyncpa [#allocation9], 1
    %733 = vsyncpa [#allocation4], 1
    %s734 = scalar_lea.sflag [#allocation4], 1
    %735 = vsyncpa %s734, 1

</llo_original>
